<compile_context>
chip_gen: v5e
topology: v5e:2x2
jax: 0.10.0
libtpu: 0.0.40
codegen_flags: <defaults>
</compile_context>

<pallas_src>
import functools

import jax
import jax.numpy as jnp
from jax import lax
from jax.experimental import pallas as pl
from jax.experimental.pallas import tpu as pltpu

EPS = 1e-5          # nn.BatchNorm2d default eps
FILTERS = 4         # config.filters (synthetic)


def _resblock_kernel(x_ref, m1_ref, g1_ref, be1_ref,
                     m2_ref, g2_ref, be2_ref,
                     pool_ref, mask_ref, o_ref, *, N, C, H, W):
    """Fused ResBlock body.

    x_ref    : (R, HW)     lane-dense view of the NCHW input, R = N*C, HW = H*W
    mK_ref   : (R, 9*R)    per-conv channel mix; tap-t block = kron(I_N, w[:,:,dy,dx])
    gK/beK   : (R, 1)      BN gamma / beta tiled onto (n, c) rows
    pool_ref : (R, R)      kron(ones(N,N), I_C): pools batch rows per channel
    mask_ref : (9, 1, HW)  per-tap validity mask (flat halo AND W boundary), {0,1} f32
    o_ref    : (R, HW)     output, same layout as the input
    """
    R = N * C
    HW = H * W
    inv_cnt = 1.0 / float(N * H * W)

    x = x_ref[...]
    P = pool_ref[...]

    def conv3x3(v, m_ref):
        # 9 lane rolls (XLU) + 1 mask multiply per tap (VPU), one MXU matmul.
        slabs = []
        for dy in range(3):
            for dx in range(3):
                t = dy * 3 + dx
                off = (dy - 1) * W + (dx - 1)           # sh[:, i] = v[:, i + off]
                rolled = v if off == 0 else pltpu.roll(v, (-off) % HW, axis=1)
                slabs.append(rolled * mask_ref[t])
        stack = jnp.concatenate(slabs, axis=0)           # (9R, HW)
        return jnp.dot(m_ref[...], stack,
                       preferred_element_type=jnp.float32)

    def batchnorm(h, g_rows, be_rows):
        # Two-pass training-mode BN; per-channel stats over (N, H, W).
        mean = jnp.sum(jnp.dot(P, h, preferred_element_type=jnp.float32),
                       axis=1, keepdims=True) * inv_cnt             # (R, 1)
        d = h - mean
        var = jnp.sum(jnp.dot(P, d * d, preferred_element_type=jnp.float32),
                      axis=1, keepdims=True) * inv_cnt               # biased var
        scale = g_rows * lax.rsqrt(var + EPS)
        return d * scale + be_rows

    g1 = g1_ref[...]; be1 = be1_ref[...]
    g2 = g2_ref[...]; be2 = be2_ref[...]

    h = conv3x3(x, m1_ref)                 # conv bias omitted: cancels under BN
    h = jnp.maximum(batchnorm(h, g1, be1), 0.0)
    h = conv3x3(h, m2_ref)
    out = jnp.maximum(batchnorm(h, g2, be2) + x, 0.0)     # residual + relu
    o_ref[...] = out.astype(o_ref.dtype)


def prepare_resblock(params, n, c, h, w):
    """One-time parameter / constant prep (hoisted out of the per-call path)."""
    hw = h * w
    eye_n = jnp.eye(n, dtype=jnp.float32)

    def mix(wgt):   # (Cout, Cin, 3, 3) -> (R, 9R), tap-major blocks of kron(I_N, w_tap)
        blocks = [jnp.kron(eye_n, wgt[:, :, dy, dx].astype(jnp.float32))
                  for dy in range(3) for dx in range(3)]
        return jnp.concatenate(blocks, axis=1)

    def rows(v):    # (C,) -> (R, 1), tiled over batch rows (n, c)
        return jnp.tile(v.reshape(c, 1).astype(jnp.float32), (n, 1))

    pool = jnp.kron(jnp.ones((n, n), jnp.float32), jnp.eye(c, dtype=jnp.float32))

    # Per-tap column masks: flat-end (H halo) validity AND W-boundary validity.
    col = jnp.arange(hw, dtype=jnp.int32)
    xpos = col % w
    masks = []
    for dy in range(3):
        for dx in range(3):
            off = (dy - 1) * w + (dx - 1)
            if off > 0:
                ok = col < (hw - off)
            elif off < 0:
                ok = col >= (-off)
            else:
                ok = jnp.ones((hw,), bool)
            if dx == 0:
                ok = ok & (xpos != 0)
            elif dx == 2:
                ok = ok & (xpos != (w - 1))
            masks.append(ok.astype(jnp.float32))
    mask = jnp.stack(masks).reshape(9, 1, hw)

    return (mix(params["w1"]), rows(params["gamma1"]), rows(params["beta1"]),
            mix(params["w2"]), rows(params["gamma2"]), rows(params["beta2"]),
            pool, mask)


@jax.jit
def resblock_apply(x_nchw, prepped):
    n, c, h, w = x_nchw.shape
    r, hw = n * c, h * w
    x2d = x_nchw.reshape(r, hw).astype(jnp.float32)   # free row-major NCHW view

    kernel = functools.partial(_resblock_kernel, N=n, C=c, H=h, W=w)

    def full(a):
        nd = a.ndim
        return pl.BlockSpec(a.shape, lambda: (0,) * nd)

    operands = (x2d,) + tuple(prepped)
    out2d = pl.pallas_call(
        kernel,
        out_shape=jax.ShapeDtypeStruct((r, hw), jnp.float32),
        in_specs=[full(a) for a in operands],
        out_specs=pl.BlockSpec((r, hw), lambda: (0, 0)),
    )(*operands)
    return out2d.reshape(n, c, h, w)


def resblock_forward(x_nchw, params):
    n, c, h, w = x_nchw.shape
    return resblock_apply(x_nchw, prepare_resblock(params, n, c, h, w))


def resblock_reference(x_nchw, params):
    """Pure-JAX reference (NCHW, mirrors the PyTorch module in training mode)."""
    def conv(x, w, b):
        y = lax.conv_general_dilated(x, w, (1, 1), ((1, 1), (1, 1)),
                                     dimension_numbers=("NCHW", "OIHW", "NCHW"))
        return y + b.reshape(1, -1, 1, 1)

    def bn(x, g, be):
        mean = jnp.mean(x, axis=(0, 2, 3), keepdims=True)
        var = jnp.mean((x - mean) ** 2, axis=(0, 2, 3), keepdims=True)
        return (x - mean) * lax.rsqrt(var + EPS) * g.reshape(1, -1, 1, 1) \
            + be.reshape(1, -1, 1, 1)

    h = jnp.maximum(bn(conv(x_nchw, params["w1"], params["b1"]),
                       params["gamma1"], params["beta1"]), 0.0)
    h = jnp.maximum(bn(conv(h, params["w2"], params["b2"]),
                       params["gamma2"], params["beta2"]) + x_nchw, 0.0)
    return h


def init_params(key, c):
    """Deterministic init mimicking PyTorch defaults (kaiming-uniform bound)."""
    fan_in = c * 3 * 3
    bound = 1.0 / jnp.sqrt(fan_in)
    k1, k2, k3, k4 = jax.random.split(key, 4)
    return {
        "w1": jax.random.uniform(k1, (c, c, 3, 3), jnp.float32, -bound, bound),
        "b1": jax.random.uniform(k2, (c,), jnp.float32, -bound, bound),
        "w2": jax.random.uniform(k3, (c, c, 3, 3), jnp.float32, -bound, bound),
        "b2": jax.random.uniform(k4, (c,), jnp.float32, -bound, bound),
        # nn.BatchNorm2d defaults: weight=1, bias=0
        "gamma1": jnp.ones((c,), jnp.float32),
        "beta1": jnp.zeros((c,), jnp.float32),
        "gamma2": jnp.ones((c,), jnp.float32),
        "beta2": jnp.zeros((c,), jnp.float32),
    }


if __name__ == "__main__":
    key = jax.random.PRNGKey(0)
    kx, kp, kx2 = jax.random.split(key, 3)

    N, C, H, W = 2, FILTERS, 16, 16
    x = jax.random.normal(kx, (N, C, H, W), jnp.float32)
    params = init_params(kp, C)

    out = jax.block_until_ready(resblock_forward(x, params))
    ref = jax.block_until_ready(resblock_reference(x, params))
    assert out.shape == (N, C, H, W)
    # 2e-3: small cushion for MXU f32 pass differences vs XLA's conv; real
    # bugs (wrong roll direction / halo mask) produce O(0.1..1) errors.
    assert jnp.max(jnp.abs(out - ref)) < 2e-3, "mismatch vs reference (16x16)"

    # Guard the flat-shift / halo indexing with H != W and N > 2.
    N2, H2, W2 = 4, 8, 16
    x2 = jax.random.normal(kx2, (N2, C, H2, W2), jnp.float32)
    out2 = jax.block_until_ready(resblock_forward(x2, params))
    ref2 = jax.block_until_ready(resblock_reference(x2, params))
    assert jnp.max(jnp.abs(out2 - ref2)) < 2e-3, "mismatch vs reference (8x16)"

    # TODO(synk): BatchNorm running_mean / running_var buffer updates (training
    # side effect) are not emitted; they do not affect the returned tensor.
    print("KERNEL_OK")
</pallas_src>

<mosaic_0001>
module attributes {stable_mosaic.version = 11 : i64} {
  func.func @_resblock_kernel(%arg0: memref<8x256xf32, #tpu.memory_space<vmem>>, %arg1: memref<8x72xf32, #tpu.memory_space<vmem>>, %arg2: memref<8x1xf32, #tpu.memory_space<vmem>>, %arg3: memref<8x1xf32, #tpu.memory_space<vmem>>, %arg4: memref<8x72xf32, #tpu.memory_space<vmem>>, %arg5: memref<8x1xf32, #tpu.memory_space<vmem>>, %arg6: memref<8x1xf32, #tpu.memory_space<vmem>>, %arg7: memref<8x8xf32, #tpu.memory_space<vmem>>, %arg8: memref<9x1x256xf32, #tpu.memory_space<vmem>>, %arg9: memref<8x256xf32, #tpu.memory_space<vmem>>) attributes {dimension_semantics = [], scalar_prefetch = 0 : i64, scratch_operands = 0 : i64, tpu.core_type = #tpu.core_type<tc>} {
    %c0 = arith.constant 0 : index
    %c0_0 = arith.constant 0 : index
    %0 = vector.load %arg0[%c0, %c0_0] : memref<8x256xf32, #tpu.memory_space<vmem>>, vector<8x256xf32>
    %c0_1 = arith.constant 0 : index
    %c0_2 = arith.constant 0 : index
    %1 = vector.load %arg7[%c0_1, %c0_2] : memref<8x8xf32, #tpu.memory_space<vmem>>, vector<8x8xf32>
    %c0_3 = arith.constant 0 : index
    %c0_4 = arith.constant 0 : index
    %2 = vector.load %arg2[%c0_3, %c0_4] : memref<8x1xf32, #tpu.memory_space<vmem>>, vector<8x1xf32>
    %c0_5 = arith.constant 0 : index
    %c0_6 = arith.constant 0 : index
    %3 = vector.load %arg3[%c0_5, %c0_6] : memref<8x1xf32, #tpu.memory_space<vmem>>, vector<8x1xf32>
    %c0_7 = arith.constant 0 : index
    %c0_8 = arith.constant 0 : index
    %4 = vector.load %arg5[%c0_7, %c0_8] : memref<8x1xf32, #tpu.memory_space<vmem>>, vector<8x1xf32>
    %c0_9 = arith.constant 0 : index
    %c0_10 = arith.constant 0 : index
    %5 = vector.load %arg6[%c0_9, %c0_10] : memref<8x1xf32, #tpu.memory_space<vmem>>, vector<8x1xf32>
    %c17_i32 = arith.constant 17 : i32
    %6 = tpu.dynamic_rotate %0 by %c17_i32 dim 1 : vector<8x256xf32>, i32 -> vector<8x256xf32>
    %c0_11 = arith.constant 0 : index
    %c0_12 = arith.constant 0 : index
    %c0_13 = arith.constant 0 : index
    %7 = vector.load %arg8[%c0_11, %c0_12, %c0_13] : memref<9x1x256xf32, #tpu.memory_space<vmem>>, vector<1x1x256xf32>
    %8 = vector.shape_cast %7 : vector<1x1x256xf32> to vector<1x256xf32>
    %9 = vector.broadcast %8 : vector<1x256xf32> to vector<8x256xf32>
    %10 = arith.mulf %6, %9 : vector<8x256xf32>
    %c16_i32 = arith.constant 16 : i32
    %11 = tpu.dynamic_rotate %0 by %c16_i32 dim 1 : vector<8x256xf32>, i32 -> vector<8x256xf32>
    %c1 = arith.constant 1 : index
    %c0_14 = arith.constant 0 : index
    %c0_15 = arith.constant 0 : index
    %12 = vector.load %arg8[%c1, %c0_14, %c0_15] : memref<9x1x256xf32, #tpu.memory_space<vmem>>, vector<1x1x256xf32>
    %13 = vector.shape_cast %12 : vector<1x1x256xf32> to vector<1x256xf32>
    %14 = vector.broadcast %13 : vector<1x256xf32> to vector<8x256xf32>
    %15 = arith.mulf %11, %14 : vector<8x256xf32>
    %c15_i32 = arith.constant 15 : i32
    %16 = tpu.dynamic_rotate %0 by %c15_i32 dim 1 : vector<8x256xf32>, i32 -> vector<8x256xf32>
    %c2 = arith.constant 2 : index
    %c0_16 = arith.constant 0 : index
    %c0_17 = arith.constant 0 : index
    %17 = vector.load %arg8[%c2, %c0_16, %c0_17] : memref<9x1x256xf32, #tpu.memory_space<vmem>>, vector<1x1x256xf32>
    %18 = vector.shape_cast %17 : vector<1x1x256xf32> to vector<1x256xf32>
    %19 = vector.broadcast %18 : vector<1x256xf32> to vector<8x256xf32>
    %20 = arith.mulf %16, %19 : vector<8x256xf32>
    %c1_i32 = arith.constant 1 : i32
    %21 = tpu.dynamic_rotate %0 by %c1_i32 dim 1 : vector<8x256xf32>, i32 -> vector<8x256xf32>
    %c3 = arith.constant 3 : index
    %c0_18 = arith.constant 0 : index
    %c0_19 = arith.constant 0 : index
    %22 = vector.load %arg8[%c3, %c0_18, %c0_19] : memref<9x1x256xf32, #tpu.memory_space<vmem>>, vector<1x1x256xf32>
    %23 = vector.shape_cast %22 : vector<1x1x256xf32> to vector<1x256xf32>
    %24 = vector.broadcast %23 : vector<1x256xf32> to vector<8x256xf32>
    %25 = arith.mulf %21, %24 : vector<8x256xf32>
    %c4 = arith.constant 4 : index
    %c0_20 = arith.constant 0 : index
    %c0_21 = arith.constant 0 : index
    %26 = vector.load %arg8[%c4, %c0_20, %c0_21] : memref<9x1x256xf32, #tpu.memory_space<vmem>>, vector<1x1x256xf32>
    %27 = vector.shape_cast %26 : vector<1x1x256xf32> to vector<1x256xf32>
    %28 = vector.broadcast %27 : vector<1x256xf32> to vector<8x256xf32>
    %29 = arith.mulf %0, %28 : vector<8x256xf32>
    %c255_i32 = arith.constant 255 : i32
    %30 = tpu.dynamic_rotate %0 by %c255_i32 dim 1 : vector<8x256xf32>, i32 -> vector<8x256xf32>
    %c5 = arith.constant 5 : index
    %c0_22 = arith.constant 0 : index
    %c0_23 = arith.constant 0 : index
    %31 = vector.load %arg8[%c5, %c0_22, %c0_23] : memref<9x1x256xf32, #tpu.memory_space<vmem>>, vector<1x1x256xf32>
    %32 = vector.shape_cast %31 : vector<1x1x256xf32> to vector<1x256xf32>
    %33 = vector.broadcast %32 : vector<1x256xf32> to vector<8x256xf32>
    %34 = arith.mulf %30, %33 : vector<8x256xf32>
    %c241_i32 = arith.constant 241 : i32
    %35 = tpu.dynamic_rotate %0 by %c241_i32 dim 1 : vector<8x256xf32>, i32 -> vector<8x256xf32>
    %c6 = arith.constant 6 : index
    %c0_24 = arith.constant 0 : index
    %c0_25 = arith.constant 0 : index
    %36 = vector.load %arg8[%c6, %c0_24, %c0_25] : memref<9x1x256xf32, #tpu.memory_space<vmem>>, vector<1x1x256xf32>
    %37 = vector.shape_cast %36 : vector<1x1x256xf32> to vector<1x256xf32>
    %38 = vector.broadcast %37 : vector<1x256xf32> to vector<8x256xf32>
    %39 = arith.mulf %35, %38 : vector<8x256xf32>
    %c240_i32 = arith.constant 240 : i32
    %40 = tpu.dynamic_rotate %0 by %c240_i32 dim 1 : vector<8x256xf32>, i32 -> vector<8x256xf32>
    %c7 = arith.constant 7 : index
    %c0_26 = arith.constant 0 : index
    %c0_27 = arith.constant 0 : index
    %41 = vector.load %arg8[%c7, %c0_26, %c0_27] : memref<9x1x256xf32, #tpu.memory_space<vmem>>, vector<1x1x256xf32>
    %42 = vector.shape_cast %41 : vector<1x1x256xf32> to vector<1x256xf32>
    %43 = vector.broadcast %42 : vector<1x256xf32> to vector<8x256xf32>
    %44 = arith.mulf %40, %43 : vector<8x256xf32>
    %c239_i32 = arith.constant 239 : i32
    %45 = tpu.dynamic_rotate %0 by %c239_i32 dim 1 : vector<8x256xf32>, i32 -> vector<8x256xf32>
    %c8 = arith.constant 8 : index
    %c0_28 = arith.constant 0 : index
    %c0_29 = arith.constant 0 : index
    %46 = vector.load %arg8[%c8, %c0_28, %c0_29] : memref<9x1x256xf32, #tpu.memory_space<vmem>>, vector<1x1x256xf32>
    %47 = vector.shape_cast %46 : vector<1x1x256xf32> to vector<1x256xf32>
    %48 = vector.broadcast %47 : vector<1x256xf32> to vector<8x256xf32>
    %49 = arith.mulf %45, %48 : vector<8x256xf32>
    %50 = tpu.concatenate %10, %15, %20, %25, %29, %34, %39, %44, %49 in 0 : vector<8x256xf32>, vector<8x256xf32>, vector<8x256xf32>, vector<8x256xf32>, vector<8x256xf32>, vector<8x256xf32>, vector<8x256xf32>, vector<8x256xf32>, vector<8x256xf32> -> vector<72x256xf32>
    %c0_30 = arith.constant 0 : index
    %c0_31 = arith.constant 0 : index
    %51 = vector.load %arg1[%c0_30, %c0_31] : memref<8x72xf32, #tpu.memory_space<vmem>>, vector<8x72xf32>
    %cst = arith.constant dense<0.000000e+00> : vector<8x256xf32>
    %52 = tpu.matmul %51, %50, %cst {dimension_numbers = #tpu.dot_dimension_numbers<[1], [0], [0], [1], [0, 0, 1, 1], [], []>} : vector<8x72xf32>, vector<72x256xf32>, vector<8x256xf32> -> vector<8x256xf32>
    %cst_32 = arith.constant dense<0.000000e+00> : vector<8x256xf32>
    %53 = tpu.matmul %1, %52, %cst_32 {dimension_numbers = #tpu.dot_dimension_numbers<[1], [0], [0], [1], [0, 0, 1, 1], [], []>} : vector<8x8xf32>, vector<8x256xf32>, vector<8x256xf32> -> vector<8x256xf32>
    %cst_33 = arith.constant dense<0.000000e+00> : vector<8xf32>
    %54 = vector.multi_reduction <add>, %53, %cst_33 [1] : vector<8x256xf32> to vector<8xf32>
    %55 = vector.shape_cast %54 : vector<8xf32> to vector<8x1xf32>
    %cst_34 = arith.constant 0.001953125 : f32
    %56 = vector.broadcast %cst_34 : f32 to vector<8x1xf32>
    %57 = arith.mulf %55, %56 : vector<8x1xf32>
    %58 = vector.broadcast %57 : vector<8x1xf32> to vector<8x256xf32>
    %59 = arith.subf %52, %58 : vector<8x256xf32>
    %60 = arith.mulf %59, %59 : vector<8x256xf32>
    %cst_35 = arith.constant dense<0.000000e+00> : vector<8x256xf32>
    %61 = tpu.matmul %1, %60, %cst_35 {dimension_numbers = #tpu.dot_dimension_numbers<[1], [0], [0], [1], [0, 0, 1, 1], [], []>} : vector<8x8xf32>, vector<8x256xf32>, vector<8x256xf32> -> vector<8x256xf32>
    %cst_36 = arith.constant dense<0.000000e+00> : vector<8xf32>
    %62 = vector.multi_reduction <add>, %61, %cst_36 [1] : vector<8x256xf32> to vector<8xf32>
    %63 = vector.shape_cast %62 : vector<8xf32> to vector<8x1xf32>
    %cst_37 = arith.constant 0.001953125 : f32
    %64 = vector.broadcast %cst_37 : f32 to vector<8x1xf32>
    %65 = arith.mulf %63, %64 : vector<8x1xf32>
    %cst_38 = arith.constant 9.99999974E-6 : f32
    %66 = vector.broadcast %cst_38 : f32 to vector<8x1xf32>
    %67 = arith.addf %65, %66 : vector<8x1xf32>
    %68 = math.rsqrt %67 : vector<8x1xf32>
    %69 = arith.mulf %2, %68 : vector<8x1xf32>
    %70 = vector.broadcast %69 : vector<8x1xf32> to vector<8x256xf32>
    %71 = arith.mulf %59, %70 : vector<8x256xf32>
    %72 = vector.broadcast %3 : vector<8x1xf32> to vector<8x256xf32>
    %73 = arith.addf %71, %72 : vector<8x256xf32>
    %cst_39 = arith.constant 0.000000e+00 : f32
    %74 = vector.broadcast %cst_39 : f32 to vector<8x256xf32>
    %75 = arith.maximumf %73, %74 : vector<8x256xf32>
    %c17_i32_40 = arith.constant 17 : i32
    %76 = tpu.dynamic_rotate %75 by %c17_i32_40 dim 1 : vector<8x256xf32>, i32 -> vector<8x256xf32>
    %c0_41 = arith.constant 0 : index
    %c0_42 = arith.constant 0 : index
    %c0_43 = arith.constant 0 : index
    %77 = vector.load %arg8[%c0_41, %c0_42, %c0_43] : memref<9x1x256xf32, #tpu.memory_space<vmem>>, vector<1x1x256xf32>
    %78 = vector.shape_cast %77 : vector<1x1x256xf32> to vector<1x256xf32>
    %79 = vector.broadcast %78 : vector<1x256xf32> to vector<8x256xf32>
    %80 = arith.mulf %76, %79 : vector<8x256xf32>
    %c16_i32_44 = arith.constant 16 : i32
    %81 = tpu.dynamic_rotate %75 by %c16_i32_44 dim 1 : vector<8x256xf32>, i32 -> vector<8x256xf32>
    %c1_45 = arith.constant 1 : index
    %c0_46 = arith.constant 0 : index
    %c0_47 = arith.constant 0 : index
    %82 = vector.load %arg8[%c1_45, %c0_46, %c0_47] : memref<9x1x256xf32, #tpu.memory_space<vmem>>, vector<1x1x256xf32>
    %83 = vector.shape_cast %82 : vector<1x1x256xf32> to vector<1x256xf32>
    %84 = vector.broadcast %83 : vector<1x256xf32> to vector<8x256xf32>
    %85 = arith.mulf %81, %84 : vector<8x256xf32>
    %c15_i32_48 = arith.constant 15 : i32
    %86 = tpu.dynamic_rotate %75 by %c15_i32_48 dim 1 : vector<8x256xf32>, i32 -> vector<8x256xf32>
    %c2_49 = arith.constant 2 : index
    %c0_50 = arith.constant 0 : index
    %c0_51 = arith.constant 0 : index
    %87 = vector.load %arg8[%c2_49, %c0_50, %c0_51] : memref<9x1x256xf32, #tpu.memory_space<vmem>>, vector<1x1x256xf32>
    %88 = vector.shape_cast %87 : vector<1x1x256xf32> to vector<1x256xf32>
    %89 = vector.broadcast %88 : vector<1x256xf32> to vector<8x256xf32>
    %90 = arith.mulf %86, %89 : vector<8x256xf32>
    %c1_i32_52 = arith.constant 1 : i32
    %91 = tpu.dynamic_rotate %75 by %c1_i32_52 dim 1 : vector<8x256xf32>, i32 -> vector<8x256xf32>
    %c3_53 = arith.constant 3 : index
    %c0_54 = arith.constant 0 : index
    %c0_55 = arith.constant 0 : index
    %92 = vector.load %arg8[%c3_53, %c0_54, %c0_55] : memref<9x1x256xf32, #tpu.memory_space<vmem>>, vector<1x1x256xf32>
    %93 = vector.shape_cast %92 : vector<1x1x256xf32> to vector<1x256xf32>
    %94 = vector.broadcast %93 : vector<1x256xf32> to vector<8x256xf32>
    %95 = arith.mulf %91, %94 : vector<8x256xf32>
    %c4_56 = arith.constant 4 : index
    %c0_57 = arith.constant 0 : index
    %c0_58 = arith.constant 0 : index
    %96 = vector.load %arg8[%c4_56, %c0_57, %c0_58] : memref<9x1x256xf32, #tpu.memory_space<vmem>>, vector<1x1x256xf32>
    %97 = vector.shape_cast %96 : vector<1x1x256xf32> to vector<1x256xf32>
    %98 = vector.broadcast %97 : vector<1x256xf32> to vector<8x256xf32>
    %99 = arith.mulf %75, %98 : vector<8x256xf32>
    %c255_i32_59 = arith.constant 255 : i32
    %100 = tpu.dynamic_rotate %75 by %c255_i32_59 dim 1 : vector<8x256xf32>, i32 -> vector<8x256xf32>
    %c5_60 = arith.constant 5 : index
    %c0_61 = arith.constant 0 : index
    %c0_62 = arith.constant 0 : index
    %101 = vector.load %arg8[%c5_60, %c0_61, %c0_62] : memref<9x1x256xf32, #tpu.memory_space<vmem>>, vector<1x1x256xf32>
    %102 = vector.shape_cast %101 : vector<1x1x256xf32> to vector<1x256xf32>
    %103 = vector.broadcast %102 : vector<1x256xf32> to vector<8x256xf32>
    %104 = arith.mulf %100, %103 : vector<8x256xf32>
    %c241_i32_63 = arith.constant 241 : i32
    %105 = tpu.dynamic_rotate %75 by %c241_i32_63 dim 1 : vector<8x256xf32>, i32 -> vector<8x256xf32>
    %c6_64 = arith.constant 6 : index
    %c0_65 = arith.constant 0 : index
    %c0_66 = arith.constant 0 : index
    %106 = vector.load %arg8[%c6_64, %c0_65, %c0_66] : memref<9x1x256xf32, #tpu.memory_space<vmem>>, vector<1x1x256xf32>
    %107 = vector.shape_cast %106 : vector<1x1x256xf32> to vector<1x256xf32>
    %108 = vector.broadcast %107 : vector<1x256xf32> to vector<8x256xf32>
    %109 = arith.mulf %105, %108 : vector<8x256xf32>
    %c240_i32_67 = arith.constant 240 : i32
    %110 = tpu.dynamic_rotate %75 by %c240_i32_67 dim 1 : vector<8x256xf32>, i32 -> vector<8x256xf32>
    %c7_68 = arith.constant 7 : index
    %c0_69 = arith.constant 0 : index
    %c0_70 = arith.constant 0 : index
    %111 = vector.load %arg8[%c7_68, %c0_69, %c0_70] : memref<9x1x256xf32, #tpu.memory_space<vmem>>, vector<1x1x256xf32>
    %112 = vector.shape_cast %111 : vector<1x1x256xf32> to vector<1x256xf32>
    %113 = vector.broadcast %112 : vector<1x256xf32> to vector<8x256xf32>
    %114 = arith.mulf %110, %113 : vector<8x256xf32>
    %c239_i32_71 = arith.constant 239 : i32
    %115 = tpu.dynamic_rotate %75 by %c239_i32_71 dim 1 : vector<8x256xf32>, i32 -> vector<8x256xf32>
    %c8_72 = arith.constant 8 : index
    %c0_73 = arith.constant 0 : index
    %c0_74 = arith.constant 0 : index
    %116 = vector.load %arg8[%c8_72, %c0_73, %c0_74] : memref<9x1x256xf32, #tpu.memory_space<vmem>>, vector<1x1x256xf32>
    %117 = vector.shape_cast %116 : vector<1x1x256xf32> to vector<1x256xf32>
    %118 = vector.broadcast %117 : vector<1x256xf32> to vector<8x256xf32>
    %119 = arith.mulf %115, %118 : vector<8x256xf32>
    %120 = tpu.concatenate %80, %85, %90, %95, %99, %104, %109, %114, %119 in 0 : vector<8x256xf32>, vector<8x256xf32>, vector<8x256xf32>, vector<8x256xf32>, vector<8x256xf32>, vector<8x256xf32>, vector<8x256xf32>, vector<8x256xf32>, vector<8x256xf32> -> vector<72x256xf32>
    %c0_75 = arith.constant 0 : index
    %c0_76 = arith.constant 0 : index
    %121 = vector.load %arg4[%c0_75, %c0_76] : memref<8x72xf32, #tpu.memory_space<vmem>>, vector<8x72xf32>
    %cst_77 = arith.constant dense<0.000000e+00> : vector<8x256xf32>
    %122 = tpu.matmul %121, %120, %cst_77 {dimension_numbers = #tpu.dot_dimension_numbers<[1], [0], [0], [1], [0, 0, 1, 1], [], []>} : vector<8x72xf32>, vector<72x256xf32>, vector<8x256xf32> -> vector<8x256xf32>
    %cst_78 = arith.constant dense<0.000000e+00> : vector<8x256xf32>
    %123 = tpu.matmul %1, %122, %cst_78 {dimension_numbers = #tpu.dot_dimension_numbers<[1], [0], [0], [1], [0, 0, 1, 1], [], []>} : vector<8x8xf32>, vector<8x256xf32>, vector<8x256xf32> -> vector<8x256xf32>
    %cst_79 = arith.constant dense<0.000000e+00> : vector<8xf32>
    %124 = vector.multi_reduction <add>, %123, %cst_79 [1] : vector<8x256xf32> to vector<8xf32>
    %125 = vector.shape_cast %124 : vector<8xf32> to vector<8x1xf32>
    %cst_80 = arith.constant 0.001953125 : f32
    %126 = vector.broadcast %cst_80 : f32 to vector<8x1xf32>
    %127 = arith.mulf %125, %126 : vector<8x1xf32>
    %128 = vector.broadcast %127 : vector<8x1xf32> to vector<8x256xf32>
    %129 = arith.subf %122, %128 : vector<8x256xf32>
    %130 = arith.mulf %129, %129 : vector<8x256xf32>
    %cst_81 = arith.constant dense<0.000000e+00> : vector<8x256xf32>
    %131 = tpu.matmul %1, %130, %cst_81 {dimension_numbers = #tpu.dot_dimension_numbers<[1], [0], [0], [1], [0, 0, 1, 1], [], []>} : vector<8x8xf32>, vector<8x256xf32>, vector<8x256xf32> -> vector<8x256xf32>
    %cst_82 = arith.constant dense<0.000000e+00> : vector<8xf32>
    %132 = vector.multi_reduction <add>, %131, %cst_82 [1] : vector<8x256xf32> to vector<8xf32>
    %133 = vector.shape_cast %132 : vector<8xf32> to vector<8x1xf32>
    %cst_83 = arith.constant 0.001953125 : f32
    %134 = vector.broadcast %cst_83 : f32 to vector<8x1xf32>
    %135 = arith.mulf %133, %134 : vector<8x1xf32>
    %cst_84 = arith.constant 9.99999974E-6 : f32
    %136 = vector.broadcast %cst_84 : f32 to vector<8x1xf32>
    %137 = arith.addf %135, %136 : vector<8x1xf32>
    %138 = math.rsqrt %137 : vector<8x1xf32>
    %139 = arith.mulf %4, %138 : vector<8x1xf32>
    %140 = vector.broadcast %139 : vector<8x1xf32> to vector<8x256xf32>
    %141 = arith.mulf %129, %140 : vector<8x256xf32>
    %142 = vector.broadcast %5 : vector<8x1xf32> to vector<8x256xf32>
    %143 = arith.addf %141, %142 : vector<8x256xf32>
    %144 = arith.addf %143, %0 : vector<8x256xf32>
    %cst_85 = arith.constant 0.000000e+00 : f32
    %145 = vector.broadcast %cst_85 : f32 to vector<8x256xf32>
    %146 = arith.maximumf %144, %145 : vector<8x256xf32>
    %c0_86 = arith.constant 0 : index
    %c0_87 = arith.constant 0 : index
    %147 = vector.load %arg9[%c0_86, %c0_87] : memref<8x256xf32, #tpu.memory_space<vmem>>, vector<8x256xf32>
    tpu.vector_store %arg9[%c0_86, %c0_87], %146 {strides = array<i32>} : memref<8x256xf32, #tpu.memory_space<vmem>>, vector<8x256xf32>,
    return
  }
}

</mosaic_0001>

<llo_original>
// kernel: resblock_apply.1
$region0: #{resblock_apply.1}
  #allocation0 [shape = 'u32[]', space=smem, size = 0x4, offset = 0x4, fixed_abs, tag = 'smem constant byte address 0x4 - core index']
  #allocation1 [shape = 'u32[72,128]{1,0:T(1,128)}', space=vmem, size = 0x9000, scoped, tag = 'internal scratch']
  %s0 = inlined_call_operand.vmem [shape: f32[8,256], index: 0, kind: input, shape index: {}]
  %s1 = inlined_call_operand.vmem [shape: f32[8,72], index: 1, kind: input, shape index: {}]
  %s2 = inlined_call_operand.vmem [shape: f32[8,1], index: 2, kind: input, shape index: {}]
  %s3 = inlined_call_operand.vmem [shape: f32[8,1], index: 3, kind: input, shape index: {}]
  %s4 = inlined_call_operand.vmem [shape: f32[8,72], index: 4, kind: input, shape index: {}]
  %s5 = inlined_call_operand.vmem [shape: f32[8,1], index: 5, kind: input, shape index: {}]
  %s6 = inlined_call_operand.vmem [shape: f32[8,1], index: 6, kind: input, shape index: {}]
  %s7 = inlined_call_operand.vmem [shape: f32[8,8], index: 7, kind: input, shape index: {}]
  %s8 = inlined_call_operand.vmem [shape: f32[9,1,256], index: 8, kind: input, shape index: {}]
  %s9 = inlined_call_operand.vmem [shape: f32[8,256], index: 9, kind: output, shape index: {}]
  %s10 = sld [smem:[#allocation0]]
  $region46: #{resblock_apply.1} parent=0
    _
  %s12 = ssub.s32 1, %s10
  %s13 = scalar_select 0, %s12, %s10
  // Predicated region
  $region2: #{resblock_apply.1} parent=0 // pred_check
    _
  $region3: #{resblock_apply.1} parent=0 // pred_check_branch
    %15 = sbr.rel (0) target = $region5
  $region4: #{resblock_apply.1} parent=0 // pred_region
    _
  $region5: #{resblock_apply.1} parent=0 // pred_fallthru
    _
  // Predicated region
  $region6: #{resblock_apply.1} parent=0 // pred_check
    _
  $region7: #{resblock_apply.1} parent=0 // pred_check_branch
    %17 = sbr.rel (0) target = $region9
  $region8: #{resblock_apply.1} parent=0 // pred_region
    _
  $region9: #{resblock_apply.1} parent=0 // pred_fallthru
    _
  // Predicated region
  $region10: #{resblock_apply.1} parent=0 // pred_check
    _
  $region11: #{resblock_apply.1} parent=0 // pred_check_branch
    %19 = sbr.rel (0) target = $region13
  $region12: #{resblock_apply.1} parent=0 // pred_region
    _
  $region13: #{resblock_apply.1} parent=0 // pred_fallthru
    _
  // Predicated region
  $region14: #{resblock_apply.1} parent=0 // pred_check
    _
  $region15: #{resblock_apply.1} parent=0 // pred_check_branch
    %21 = sbr.rel (0) target = $region17
  $region16: #{resblock_apply.1} parent=0 // pred_region
    _
  $region17: #{resblock_apply.1} parent=0 // pred_fallthru
    _
  // Predicated region
  $region18: #{resblock_apply.1} parent=0 // pred_check
    _
  $region19: #{resblock_apply.1} parent=0 // pred_check_branch
    %23 = sbr.rel (0) target = $region21
  $region20: #{resblock_apply.1} parent=0 // pred_region
    _
  $region21: #{resblock_apply.1} parent=0 // pred_fallthru
    _
  // Predicated region
  $region22: #{resblock_apply.1} parent=0 // pred_check
    _
  $region23: #{resblock_apply.1} parent=0 // pred_check_branch
    %25 = sbr.rel (0) target = $region25
  $region24: #{resblock_apply.1} parent=0 // pred_region
    _
  $region25: #{resblock_apply.1} parent=0 // pred_fallthru
    _
  // Predicated region
  $region26: #{resblock_apply.1} parent=0 // pred_check
    _
  $region27: #{resblock_apply.1} parent=0 // pred_check_branch
    %27 = sbr.rel (0) target = $region29
  $region28: #{resblock_apply.1} parent=0 // pred_region
    _
  $region29: #{resblock_apply.1} parent=0 // pred_fallthru
    _
  // Predicated region
  $region30: #{resblock_apply.1} parent=0 // pred_check
    _
  $region31: #{resblock_apply.1} parent=0 // pred_check_branch
    %29 = sbr.rel (0) target = $region33
  $region32: #{resblock_apply.1} parent=0 // pred_region
    _
  $region33: #{resblock_apply.1} parent=0 // pred_fallthru
    _
  // Predicated region
  $region34: #{resblock_apply.1} parent=0 // pred_check
    _
  $region35: #{resblock_apply.1} parent=0 // pred_check_branch
    %31 = sbr.rel (0) target = $region37
  $region36: #{resblock_apply.1} parent=0 // pred_region
    _
  $region37: #{resblock_apply.1} parent=0 // pred_fallthru
    _
  %v32 = vld [vmem:[%s0] sm:$0xff]
  %v33 = vld [vmem:[%s0 + $0x8] sm:$0xff]
  %v34 = vld [vmem:[%s7] sm:$0xff]
  %v35 = vld [vmem:[%s2] sm:$0xff]
  %v36 = vld [vmem:[%s3] sm:$0xff]
  %v37 = vld [vmem:[%s5] sm:$0xff]
  %v38 = vld [vmem:[%s6] sm:$0xff]
  %39 = vrot.lane.b32.xlu0 %v32, 17
  %v40 = vpop.permute.xlu0 %39
  %41 = vrot.lane.b32.xlu0 %v33, 17
  %v42 = vpop.permute.xlu0 %41
  %v43 = vlaneseq
  %v44 = vand.u32 %v43, 127
  %vm45 = vcmp.lt.s32.totalorder %v44, 17
  %v46 = vsel %vm45, %v40, %v42
  %v47 = vsel %vm45, %v42, %v40
  %v48 = vld [vmem:[%s8] sm:$0x3]
  %v50 = vperm.slane %v48, 0
  %v51 = vperm.slane %v48, 1
  %v54 = vmul.f32 %v47, %v50
  %v55 = vmul.f32 %v46, %v51
  %56 = vrot.lane.b32.xlu0 %v32, 16
  %v57 = vpop.permute.xlu0 %56
  %58 = vrot.lane.b32.xlu0 %v33, 16
  %v59 = vpop.permute.xlu0 %58
  %vm60 = vcmp.lt.s32.totalorder %v44, 16
  %v61 = vsel %vm60, %v57, %v59
  %v62 = vsel %vm60, %v59, %v57
  %s63 = scalar_lea.vmem %s8, 2
  %v64 = vld [vmem:[%s63] sm:$0x3]
  %v66 = vperm.slane %v64, 0
  %v67 = vperm.slane %v64, 1
  %v70 = vmul.f32 %v62, %v66
  %v71 = vmul.f32 %v61, %v67
  %72 = vrot.lane.b32.xlu0 %v32, 15
  %v73 = vpop.permute.xlu0 %72
  %74 = vrot.lane.b32.xlu0 %v33, 15
  %v75 = vpop.permute.xlu0 %74
  %vm76 = vcmp.lt.s32.totalorder %v44, 15
  %v77 = vsel %vm76, %v73, %v75
  %v78 = vsel %vm76, %v75, %v73
  %s79 = scalar_lea.vmem %s8, 4
  %v80 = vld [vmem:[%s79] sm:$0x3]
  %v82 = vperm.slane %v80, 0
  %v83 = vperm.slane %v80, 1
  %v86 = vmul.f32 %v78, %v82
  %v87 = vmul.f32 %v77, %v83
  %88 = vrot.lane.b32.xlu0 %v32, 1
  %v89 = vpop.permute.xlu0 %88
  %90 = vrot.lane.b32.xlu0 %v33, 1
  %v91 = vpop.permute.xlu0 %90
  %vm92 = vcmp.lt.s32.totalorder %v44, 1
  %v93 = vsel %vm92, %v89, %v91
  %v94 = vsel %vm92, %v91, %v89
  %s95 = scalar_lea.vmem %s8, 6
  %v96 = vld [vmem:[%s95] sm:$0x3]
  %v98 = vperm.slane %v96, 0
  %v99 = vperm.slane %v96, 1
  %v102 = vmul.f32 %v94, %v98
  %v103 = vmul.f32 %v93, %v99
  %s104 = scalar_lea.vmem %s8, 8
  %v105 = vld [vmem:[%s104] sm:$0x3]
  %v107 = vperm.slane %v105, 0
  %v108 = vperm.slane %v105, 1
  %v111 = vmul.f32 %v32, %v107
  %v112 = vmul.f32 %v33, %v108
  %113 = vrot.lane.b32.xlu0 %v32, 127
  %v114 = vpop.permute.xlu0 %113
  %115 = vrot.lane.b32.xlu0 %v33, 127
  %v116 = vpop.permute.xlu0 %115
  %vm117 = vcmp.lt.s32.totalorder %v44, 127
  %v118 = vsel %vm117, %v114, %v116
  %v119 = vsel %vm117, %v116, %v114
  %s120 = scalar_lea.vmem %s8, 10
  %v121 = vld [vmem:[%s120] sm:$0x3]
  %v123 = vperm.slane %v121, 0
  %v124 = vperm.slane %v121, 1
  %v127 = vmul.f32 %v118, %v123
  %v128 = vmul.f32 %v119, %v124
  %129 = vrot.lane.b32.xlu0 %v32, 113
  %v130 = vpop.permute.xlu0 %129
  %131 = vrot.lane.b32.xlu0 %v33, 113
  %v132 = vpop.permute.xlu0 %131
  %vm133 = vcmp.lt.s32.totalorder %v44, 113
  %v134 = vsel %vm133, %v130, %v132
  %v135 = vsel %vm133, %v132, %v130
  %s136 = scalar_lea.vmem %s8, 12
  %v137 = vld [vmem:[%s136] sm:$0x3]
  %v139 = vperm.slane %v137, 0
  %v140 = vperm.slane %v137, 1
  %v143 = vmul.f32 %v134, %v139
  %v144 = vmul.f32 %v135, %v140
  %145 = vrot.lane.b32.xlu0 %v32, 112
  %v146 = vpop.permute.xlu0 %145
  %147 = vrot.lane.b32.xlu0 %v33, 112
  %v148 = vpop.permute.xlu0 %147
  %vm149 = vcmp.lt.s32.totalorder %v44, 112
  %v150 = vsel %vm149, %v146, %v148
  %v151 = vsel %vm149, %v148, %v146
  %s152 = scalar_lea.vmem %s8, 14
  %v153 = vld [vmem:[%s152] sm:$0x3]
  %v155 = vperm.slane %v153, 0
  %v156 = vperm.slane %v153, 1
  %v159 = vmul.f32 %v150, %v155
  %v160 = vmul.f32 %v151, %v156
  %161 = vrot.lane.b32.xlu0 %v32, 111
  %v162 = vpop.permute.xlu0 %161
  %163 = vrot.lane.b32.xlu0 %v33, 111
  %v164 = vpop.permute.xlu0 %163
  %vm165 = vcmp.lt.s32.totalorder %v44, 111
  %v166 = vsel %vm165, %v162, %v164
  %v167 = vsel %vm165, %v164, %v162
  %s168 = scalar_lea.vmem %s8, 16
  %v169 = vld [vmem:[%s168] sm:$0x3]
  %v171 = vperm.slane %v169, 0
  %v172 = vperm.slane %v169, 1
  %v175 = vmul.f32 %v166, %v171
  %v176 = vmul.f32 %v167, %v172
  %v177 = vld [vmem:[%s1] sm:$0xff]
  %vm178 = vcmask 588800
  %v180 = vsel %vm178, %v177, 0
  %182 = vmatpush.msra.mxu0 0.0
  %183 = vmatpush.msra.mxu0 0.0
  %184 = vmatpush.msra.mxu0 0.0
  %185 = vmatpush.msra.mxu0 0.0
  %186 = vmatpush.msra.mxu0 0.0
  %187 = vmatpush.msra.mxu0 0.0
  %188 = vmatpush.msra.mxu0 0.0
  %189 = vmatpush.msra.mxu0 %v175
  %190 = vmatpush.msra.mxu0 %v159
  %191 = vmatpush.msra.mxu0 %v143
  %192 = vmatpush.msra.mxu0 %v127
  %193 = vmatpush.msra.mxu0 %v111
  %194 = vmatpush.msra.mxu0 %v102
  %195 = vmatpush.msra.mxu0 %v86
  %196 = vmatpush.msra.mxu0 %v70
  %197 = vmatpush.msra.mxu0 %v54
  %198 = vmatmul.f32.gmra.mxu0 %v180
  %v199 = vpop.f32.mrf.mxu0
  %v200 = vadd.f32 0.0, %v199
  %201 = vdwg.mxu0
  %202 = vmatpush.msra.mxu0 0.0
  %203 = vmatpush.msra.mxu0 0.0
  %204 = vmatpush.msra.mxu0 0.0
  %205 = vmatpush.msra.mxu0 0.0
  %206 = vmatpush.msra.mxu0 0.0
  %207 = vmatpush.msra.mxu0 0.0
  %208 = vmatpush.msra.mxu0 0.0
  %209 = vmatpush.msra.mxu0 %v176
  %210 = vmatpush.msra.mxu0 %v160
  %211 = vmatpush.msra.mxu0 %v144
  %212 = vmatpush.msra.mxu0 %v128
  %213 = vmatpush.msra.mxu0 %v112
  %214 = vmatpush.msra.mxu0 %v103
  %215 = vmatpush.msra.mxu0 %v87
  %216 = vmatpush.msra.mxu0 %v71
  %217 = vmatpush.msra.mxu0 %v55
  %218 = vmatmul.f32.gmra.mxu0 %v180
  %v219 = vpop.f32.mrf.mxu0
  %v220 = vadd.f32 0.0, %v219
  %221 = vdwg.mxu0
  %vm222 = vcmask 64512
  %v224 = vsel %vm222, %v34, 0
  %226 = vmatpush.msra.mxu0 0.0
  %227 = vmatpush.msra.mxu0 0.0
  %228 = vmatpush.msra.mxu0 0.0
  %229 = vmatpush.msra.mxu0 0.0
  %230 = vmatpush.msra.mxu0 0.0
  %231 = vmatpush.msra.mxu0 0.0
  %232 = vmatpush.msra.mxu0 0.0
  %233 = vmatpush.msra.mxu0 0.0
  %234 = vmatpush.msra.mxu0 0.0
  %235 = vmatpush.msra.mxu0 0.0
  %236 = vmatpush.msra.mxu0 0.0
  %237 = vmatpush.msra.mxu0 0.0
  %238 = vmatpush.msra.mxu0 0.0
  %239 = vmatpush.msra.mxu0 0.0
  %240 = vmatpush.msra.mxu0 0.0
  %241 = vmatpush.msra.mxu0 %v200
  %242 = vmatmul.f32.gmra.mxu0 %v224
  %v243 = vpop.f32.mrf.mxu0
  %v244 = vadd.f32 0.0, %v243
  %245 = vdwg.mxu0
  %246 = vmatpush.msra.mxu0 0.0
  %247 = vmatpush.msra.mxu0 0.0
  %248 = vmatpush.msra.mxu0 0.0
  %249 = vmatpush.msra.mxu0 0.0
  %250 = vmatpush.msra.mxu0 0.0
  %251 = vmatpush.msra.mxu0 0.0
  %252 = vmatpush.msra.mxu0 0.0
  %253 = vmatpush.msra.mxu0 0.0
  %254 = vmatpush.msra.mxu0 0.0
  %255 = vmatpush.msra.mxu0 0.0
  %256 = vmatpush.msra.mxu0 0.0
  %257 = vmatpush.msra.mxu0 0.0
  %258 = vmatpush.msra.mxu0 0.0
  %259 = vmatpush.msra.mxu0 0.0
  %260 = vmatpush.msra.mxu0 0.0
  %261 = vmatpush.msra.mxu0 %v220
  %262 = vmatmul.f32.gmra.mxu0 %v224
  %v263 = vpop.f32.mrf.mxu0
  %v264 = vadd.f32 0.0, %v263
  %265 = vdwg.mxu0
  %v266 = vadd.f32 %v244, %v264
  %267 = vadd.xlane.f32.xlu0 %v266
  %v268 = vpop.xlane.xlu0 %267
  %v269 = vmul.f32 %v268, 0.001953125
  %v270 = vsub.f32 %v200, %v269
  %v271 = vsub.f32 %v220, %v269
  %v272 = vmul.f32 %v270, %v270
  %v273 = vmul.f32 %v271, %v271
  %274 = vmatpush.msra.mxu0 0.0
  %275 = vmatpush.msra.mxu0 0.0
  %276 = vmatpush.msra.mxu0 0.0
  %277 = vmatpush.msra.mxu0 0.0
  %278 = vmatpush.msra.mxu0 0.0
  %279 = vmatpush.msra.mxu0 0.0
  %280 = vmatpush.msra.mxu0 0.0
  %281 = vmatpush.msra.mxu0 0.0
  %282 = vmatpush.msra.mxu0 0.0
  %283 = vmatpush.msra.mxu0 0.0
  %284 = vmatpush.msra.mxu0 0.0
  %285 = vmatpush.msra.mxu0 0.0
  %286 = vmatpush.msra.mxu0 0.0
  %287 = vmatpush.msra.mxu0 0.0
  %288 = vmatpush.msra.mxu0 0.0
  %289 = vmatpush.msra.mxu0 %v272
  %290 = vmatmul.f32.gmra.mxu0 %v224
  %v291 = vpop.f32.mrf.mxu0
  %v292 = vadd.f32 0.0, %v291
  %293 = vdwg.mxu0
  %294 = vmatpush.msra.mxu0 0.0
  %295 = vmatpush.msra.mxu0 0.0
  %296 = vmatpush.msra.mxu0 0.0
  %297 = vmatpush.msra.mxu0 0.0
  %298 = vmatpush.msra.mxu0 0.0
  %299 = vmatpush.msra.mxu0 0.0
  %300 = vmatpush.msra.mxu0 0.0
  %301 = vmatpush.msra.mxu0 0.0
  %302 = vmatpush.msra.mxu0 0.0
  %303 = vmatpush.msra.mxu0 0.0
  %304 = vmatpush.msra.mxu0 0.0
  %305 = vmatpush.msra.mxu0 0.0
  %306 = vmatpush.msra.mxu0 0.0
  %307 = vmatpush.msra.mxu0 0.0
  %308 = vmatpush.msra.mxu0 0.0
  %309 = vmatpush.msra.mxu0 %v273
  %310 = vmatmul.f32.gmra.mxu0 %v224
  %v311 = vpop.f32.mrf.mxu0
  %v312 = vadd.f32 0.0, %v311
  %313 = vdwg.mxu0
  %v314 = vadd.f32 %v292, %v312
  %315 = vadd.xlane.f32.xlu0 %v314
  %v316 = vpop.xlane.xlu0 %315
  %v317 = vmul.f32 %v316, 0.001953125
  %v318 = vadd.f32 %v317, 1e-05
  %v319 = vrsqrt.pop %v318
  %v320 = vmul.f32 %v319, %v318
  %v321 = vmul.f32 %v320, %v319
  %v322 = vmul.f32 0.5, %v321
  %v323 = vsub.f32 1.5, %v322
  %v324 = vmul.f32 %v319, %v323
  %vm325 = vweird.f32 %v318
  %vm326 = vweird.f32 %v319
  %vm327 = vmor %vm325, %vm326
  %v328 = vsel %vm327, %v319, %v324
  %v329 = vmul.f32 %v35, %v328
  %331 = vset.pattern.permute.xlu0 0
  %332 = vperm.xlu0 %331, %v329
  %v333 = vpop.permute.xlu0 %332
  %v335 = vmul.f32 %v270, %v333
  %v336 = vmul.f32 %v271, %v333
  %338 = vset.pattern.permute.xlu0 0
  %339 = vperm.xlu0 %338, %v36
  %v340 = vpop.permute.xlu0 %339
  %v342 = vadd.f32 %v335, %v340
  %v343 = vadd.f32 %v336, %v340
  %v344 = vmax.f32 %v342, 0.0
  %v345 = vmax.f32 %v343, 0.0
  %346 = vrot.lane.b32.xlu0 %v344, 17
  %v347 = vpop.permute.xlu0 %346
  %348 = vrot.lane.b32.xlu0 %v345, 17
  %v349 = vpop.permute.xlu0 %348
  %v350 = vsel %vm45, %v347, %v349
  %v351 = vsel %vm45, %v349, %v347
  %v352 = vmul.f32 %v351, %v50
  %v353 = vmul.f32 %v350, %v51
  %354 = vrot.lane.b32.xlu0 %v344, 16
  %v355 = vpop.permute.xlu0 %354
  %356 = vrot.lane.b32.xlu0 %v345, 16
  %v357 = vpop.permute.xlu0 %356
  %v358 = vsel %vm60, %v355, %v357
  %v359 = vsel %vm60, %v357, %v355
  %v360 = vmul.f32 %v359, %v66
  %v361 = vmul.f32 %v358, %v67
  %362 = vrot.lane.b32.xlu0 %v344, 15
  %v363 = vpop.permute.xlu0 %362
  %364 = vrot.lane.b32.xlu0 %v345, 15
  %v365 = vpop.permute.xlu0 %364
  %v366 = vsel %vm76, %v363, %v365
  %v367 = vsel %vm76, %v365, %v363
  %v368 = vmul.f32 %v367, %v82
  %v369 = vmul.f32 %v366, %v83
  %370 = vrot.lane.b32.xlu0 %v344, 1
  %v371 = vpop.permute.xlu0 %370
  %372 = vrot.lane.b32.xlu0 %v345, 1
  %v373 = vpop.permute.xlu0 %372
  %v374 = vsel %vm92, %v371, %v373
  %v375 = vsel %vm92, %v373, %v371
  %v376 = vmul.f32 %v375, %v98
  %v377 = vmul.f32 %v374, %v99
  %v378 = vmul.f32 %v344, %v107
  %v379 = vmul.f32 %v345, %v108
  %380 = vrot.lane.b32.xlu0 %v344, 127
  %v381 = vpop.permute.xlu0 %380
  %382 = vrot.lane.b32.xlu0 %v345, 127
  %v383 = vpop.permute.xlu0 %382
  %v384 = vsel %vm117, %v381, %v383
  %v385 = vsel %vm117, %v383, %v381
  %v386 = vmul.f32 %v384, %v123
  %v387 = vmul.f32 %v385, %v124
  %388 = vrot.lane.b32.xlu0 %v344, 113
  %v389 = vpop.permute.xlu0 %388
  %390 = vrot.lane.b32.xlu0 %v345, 113
  %v391 = vpop.permute.xlu0 %390
  %v392 = vsel %vm133, %v389, %v391
  %v393 = vsel %vm133, %v391, %v389
  %v394 = vmul.f32 %v392, %v139
  %v395 = vmul.f32 %v393, %v140
  %396 = vrot.lane.b32.xlu0 %v344, 112
  %v397 = vpop.permute.xlu0 %396
  %398 = vrot.lane.b32.xlu0 %v345, 112
  %v399 = vpop.permute.xlu0 %398
  %v400 = vsel %vm149, %v397, %v399
  %v401 = vsel %vm149, %v399, %v397
  %v402 = vmul.f32 %v400, %v155
  %v403 = vmul.f32 %v401, %v156
  %404 = vrot.lane.b32.xlu0 %v344, 111
  %v405 = vpop.permute.xlu0 %404
  %406 = vrot.lane.b32.xlu0 %v345, 111
  %v407 = vpop.permute.xlu0 %406
  %v408 = vsel %vm165, %v405, %v407
  %v409 = vsel %vm165, %v407, %v405
  %v410 = vmul.f32 %v408, %v171
  %v411 = vmul.f32 %v409, %v172
  %v412 = vld [vmem:[%s4] sm:$0xff]
  %v414 = vsel %vm178, %v412, 0
  %416 = vmatpush.msra.mxu0 0.0
  %417 = vmatpush.msra.mxu0 0.0
  %418 = vmatpush.msra.mxu0 0.0
  %419 = vmatpush.msra.mxu0 0.0
  %420 = vmatpush.msra.mxu0 0.0
  %421 = vmatpush.msra.mxu0 0.0
  %422 = vmatpush.msra.mxu0 0.0
  %423 = vmatpush.msra.mxu0 %v410
  %424 = vmatpush.msra.mxu0 %v402
  %425 = vmatpush.msra.mxu0 %v394
  %426 = vmatpush.msra.mxu0 %v386
  %427 = vmatpush.msra.mxu0 %v378
  %428 = vmatpush.msra.mxu0 %v376
  %429 = vmatpush.msra.mxu0 %v368
  %430 = vmatpush.msra.mxu0 %v360
  %431 = vmatpush.msra.mxu0 %v352
  %432 = vmatmul.f32.gmra.mxu0 %v414
  %v433 = vpop.f32.mrf.mxu0
  %v434 = vadd.f32 0.0, %v433
  %435 = vdwg.mxu0
  %436 = vmatpush.msra.mxu0 0.0
  %437 = vmatpush.msra.mxu0 0.0
  %438 = vmatpush.msra.mxu0 0.0
  %439 = vmatpush.msra.mxu0 0.0
  %440 = vmatpush.msra.mxu0 0.0
  %441 = vmatpush.msra.mxu0 0.0
  %442 = vmatpush.msra.mxu0 0.0
  %443 = vmatpush.msra.mxu0 %v411
  %444 = vmatpush.msra.mxu0 %v403
  %445 = vmatpush.msra.mxu0 %v395
  %446 = vmatpush.msra.mxu0 %v387
  %447 = vmatpush.msra.mxu0 %v379
  %448 = vmatpush.msra.mxu0 %v377
  %449 = vmatpush.msra.mxu0 %v369
  %450 = vmatpush.msra.mxu0 %v361
  %451 = vmatpush.msra.mxu0 %v353
  %452 = vmatmul.f32.gmra.mxu0 %v414
  %v453 = vpop.f32.mrf.mxu0
  %v454 = vadd.f32 0.0, %v453
  %455 = vdwg.mxu0
  %456 = vmatpush.msra.mxu0 0.0
  %457 = vmatpush.msra.mxu0 0.0
  %458 = vmatpush.msra.mxu0 0.0
  %459 = vmatpush.msra.mxu0 0.0
  %460 = vmatpush.msra.mxu0 0.0
  %461 = vmatpush.msra.mxu0 0.0
  %462 = vmatpush.msra.mxu0 0.0
  %463 = vmatpush.msra.mxu0 0.0
  %464 = vmatpush.msra.mxu0 0.0
  %465 = vmatpush.msra.mxu0 0.0
  %466 = vmatpush.msra.mxu0 0.0
  %467 = vmatpush.msra.mxu0 0.0
  %468 = vmatpush.msra.mxu0 0.0
  %469 = vmatpush.msra.mxu0 0.0
  %470 = vmatpush.msra.mxu0 0.0
  %471 = vmatpush.msra.mxu0 %v434
  %472 = vmatmul.f32.gmra.mxu0 %v224
  %v473 = vpop.f32.mrf.mxu0
  %v474 = vadd.f32 0.0, %v473
  %475 = vdwg.mxu0
  %476 = vmatpush.msra.mxu0 0.0
  %477 = vmatpush.msra.mxu0 0.0
  %478 = vmatpush.msra.mxu0 0.0
  %479 = vmatpush.msra.mxu0 0.0
  %480 = vmatpush.msra.mxu0 0.0
  %481 = vmatpush.msra.mxu0 0.0
  %482 = vmatpush.msra.mxu0 0.0
  %483 = vmatpush.msra.mxu0 0.0
  %484 = vmatpush.msra.mxu0 0.0
  %485 = vmatpush.msra.mxu0 0.0
  %486 = vmatpush.msra.mxu0 0.0
  %487 = vmatpush.msra.mxu0 0.0
  %488 = vmatpush.msra.mxu0 0.0
  %489 = vmatpush.msra.mxu0 0.0
  %490 = vmatpush.msra.mxu0 0.0
  %491 = vmatpush.msra.mxu0 %v454
  %492 = vmatmul.f32.gmra.mxu0 %v224
  %v493 = vpop.f32.mrf.mxu0
  %v494 = vadd.f32 0.0, %v493
  %495 = vdwg.mxu0
  %v496 = vadd.f32 %v474, %v494
  %497 = vadd.xlane.f32.xlu0 %v496
  %v498 = vpop.xlane.xlu0 %497
  %v499 = vmul.f32 %v498, 0.001953125
  %v500 = vsub.f32 %v434, %v499
  %v501 = vsub.f32 %v454, %v499
  %v502 = vmul.f32 %v500, %v500
  %v503 = vmul.f32 %v501, %v501
  %504 = vmatpush.msra.mxu0 0.0
  %505 = vmatpush.msra.mxu0 0.0
  %506 = vmatpush.msra.mxu0 0.0
  %507 = vmatpush.msra.mxu0 0.0
  %508 = vmatpush.msra.mxu0 0.0
  %509 = vmatpush.msra.mxu0 0.0
  %510 = vmatpush.msra.mxu0 0.0
  %511 = vmatpush.msra.mxu0 0.0
  %512 = vmatpush.msra.mxu0 0.0
  %513 = vmatpush.msra.mxu0 0.0
  %514 = vmatpush.msra.mxu0 0.0
  %515 = vmatpush.msra.mxu0 0.0
  %516 = vmatpush.msra.mxu0 0.0
  %517 = vmatpush.msra.mxu0 0.0
  %518 = vmatpush.msra.mxu0 0.0
  %519 = vmatpush.msra.mxu0 %v502
  %520 = vmatmul.f32.gmra.mxu0 %v224
  %v521 = vpop.f32.mrf.mxu0
  %v522 = vadd.f32 0.0, %v521
  %523 = vdwg.mxu0
  %524 = vmatpush.msra.mxu0 0.0
  %525 = vmatpush.msra.mxu0 0.0
  %526 = vmatpush.msra.mxu0 0.0
  %527 = vmatpush.msra.mxu0 0.0
  %528 = vmatpush.msra.mxu0 0.0
  %529 = vmatpush.msra.mxu0 0.0
  %530 = vmatpush.msra.mxu0 0.0
  %531 = vmatpush.msra.mxu0 0.0
  %532 = vmatpush.msra.mxu0 0.0
  %533 = vmatpush.msra.mxu0 0.0
  %534 = vmatpush.msra.mxu0 0.0
  %535 = vmatpush.msra.mxu0 0.0
  %536 = vmatpush.msra.mxu0 0.0
  %537 = vmatpush.msra.mxu0 0.0
  %538 = vmatpush.msra.mxu0 0.0
  %539 = vmatpush.msra.mxu0 %v503
  %540 = vmatmul.f32.gmra.mxu0 %v224
  %v541 = vpop.f32.mrf.mxu0
  %v542 = vadd.f32 0.0, %v541
  %543 = vdwg.mxu0
  %v544 = vadd.f32 %v522, %v542
  %545 = vadd.xlane.f32.xlu0 %v544
  %v546 = vpop.xlane.xlu0 %545
  %v547 = vmul.f32 %v546, 0.001953125
  %v548 = vadd.f32 %v547, 1e-05
  %v549 = vrsqrt.pop %v548
  %v550 = vmul.f32 %v549, %v548
  %v551 = vmul.f32 %v550, %v549
  %v552 = vmul.f32 0.5, %v551
  %v553 = vsub.f32 1.5, %v552
  %v554 = vmul.f32 %v549, %v553
  %vm555 = vweird.f32 %v548
  %vm556 = vweird.f32 %v549
  %vm557 = vmor %vm555, %vm556
  %v558 = vsel %vm557, %v549, %v554
  %v559 = vmul.f32 %v37, %v558
  %561 = vset.pattern.permute.xlu0 0
  %562 = vperm.xlu0 %561, %v559
  %v563 = vpop.permute.xlu0 %562
  %v565 = vmul.f32 %v500, %v563
  %v566 = vmul.f32 %v501, %v563
  %568 = vset.pattern.permute.xlu0 0
  %569 = vperm.xlu0 %568, %v38
  %v570 = vpop.permute.xlu0 %569
  %v572 = vadd.f32 %v565, %v570
  %v573 = vadd.f32 %v566, %v570
  %v574 = vadd.f32 %v572, %v32
  %v575 = vadd.f32 %v573, %v33
  %v576 = vmax.f32 %v574, 0.0
  %v577 = vmax.f32 %v575, 0.0
  %578 = vst [vmem:[%s9] sm:$0xff] %v576
  %579 = vst [vmem:[%s9 + $0x8] sm:$0xff] %v577
  // Predicated region
  $region38: #{resblock_apply.1} parent=0 // pred_check
    _
  $region39: #{resblock_apply.1} parent=0 // pred_check_branch
    %581 = sbr.rel (0) target = $region41
  $region40: #{resblock_apply.1} parent=0 // pred_region
    _
  $region41: #{resblock_apply.1} parent=0 // pred_fallthru
    _
  // Predicated region
  $region42: #{resblock_apply.1} parent=0 // pred_check
    _
  $region43: #{resblock_apply.1} parent=0 // pred_check_branch
    %583 = sbr.rel (0) target = $region45
  $region44: #{resblock_apply.1} parent=0 // pred_region
    _
  $region45: #{resblock_apply.1} parent=0 // pred_fallthru
    _

</llo_original>
